<compile_context>
chip_gen: v6e
topology: v6e:2x2x1
jax: 0.10.0
libtpu: 0.0.40
codegen_flags: <defaults>
</compile_context>

<pallas_src>
import functools

import jax
import jax.numpy as jnp
from jax.experimental import pallas as pl
from jax.experimental.pallas import tpu as pltpu


def _round_up(a, b):
    return (a + b - 1) // b * b


def _mlp_kernel(x_ref, w1_ref, w2_ref, w3_ref, o_ref, v1_ref, v3_ref,
                *, leak, v_th):
    # x_ref: (1, tm, dp)   w*_ref: (dp, dp), already transposed
    # o_ref: (1, tm, dp)   v1_ref / v3_ref: (tm, dp) f32 membrane scratch
    t = pl.program_id(1)

    @pl.when(t == 0)
    def _():
        v1_ref[...] = jnp.zeros_like(v1_ref)
        v3_ref[...] = jnp.zeros_like(v3_ref)

    x = x_ref[0].astype(jnp.float32)

    # mlp1_lif / mlp2_lif (same config + same input -> same spike train).
    v1 = v1_ref[...] * leak + x                      # decay_input=False, v_reset=0
    s = (v1 >= v_th).astype(jnp.float32)
    v1_ref[...] = v1 * (1.0 - s)                     # hard reset to 0

    w1 = w1_ref[...].astype(jnp.float32)
    w2 = w2_ref[...].astype(jnp.float32)
    w3 = w3_ref[...].astype(jnp.float32)

    y1 = jnp.dot(s, w1, preferred_element_type=jnp.float32)
    y2 = jnp.dot(s, w2, preferred_element_type=jnp.float32)

    # mlp3_lif driven by y2.
    v3 = v3_ref[...] * leak + y2
    s3 = (v3 >= v_th).astype(jnp.float32)
    v3_ref[...] = v3 * (1.0 - s3)

    out = jnp.dot(y1 * s3, w3, preferred_element_type=jnp.float32)
    o_ref[0] = out.astype(o_ref.dtype)


def spiking_mlp(x, w1, w2, w3, *, tau=2.0, v_threshold=1.0, tile_rows=512):
    """Forward pass of the SDiT MLP block. x: (T, B, C, N); w*: (N, N)."""
    T, B, C, N = x.shape
    d = N
    for w in (w1, w2, w3):
        assert w.shape == (d, d)

    out_dtype = jnp.result_type(x.dtype, w1.dtype, w2.dtype, w3.dtype)

    m = B * C
    x3 = x.reshape(T, m, d)

    # Lane-dense feature dim (multiple of 128).
    dp = _round_up(d, 128)

    def pad_wt(w):
        # Transpose so the kernel computes s @ W^T directly, then zero-pad.
        wt = w.T
        if dp == d:
            return wt
        return jnp.zeros((dp, dp), w.dtype).at[:d, :d].set(wt)

    w1t, w2t, w3t = pad_wt(w1), pad_wt(w2), pad_wt(w3)

    # Generation-aware VMEM budget (v7x: 64 MiB/core, v5e/v6e: 128 MiB).
    try:
        vmem_cap = int(pltpu.get_tpu_info().vmem_capacity_bytes)
    except Exception:
        vmem_cap = 64 * 1024 * 1024          # conservative default (v7x size)
    vmem_limit = min(int(vmem_cap * 0.8), 96 * 1024 * 1024)
    budget = int(vmem_cap * 0.65)

    in_bytes = jnp.dtype(x.dtype).itemsize
    out_bytes = jnp.dtype(out_dtype).itemsize
    w_bytes = jnp.dtype(w1.dtype).itemsize
    per_row = 2 * dp * (in_bytes + out_bytes)    # x + out blocks, double-buffered
    per_row += 2 * dp * 4                        # two f32 membrane scratch rows
    weight_bytes = 3 * dp * dp * w_bytes * 2     # conservative: double-buffered
    avail = max(budget - weight_bytes, per_row * 8)
    tm_cap = max(8, int(avail // per_row) // 8 * 8)

    tm = max(8, min(int(tile_rows), tm_cap) // 8 * 8)
    m8 = _round_up(m, 8)
    if tm >= m8:
        tm = m8                                  # one row tile covers all rows
    mp = _round_up(m, tm)

    if mp != m or dp != d:
        # Pad rows/features instead of shrinking the tile; zero padding is
        # inert through the LIFs (0 never crosses the threshold) and the
        # bias-free matmuls.
        x3 = jnp.zeros((T, mp, dp), x.dtype).at[:, :m, :d].set(x3)

    grid = (mp // tm, T)   # time innermost: membrane state carried in scratch

    kernel = functools.partial(
        _mlp_kernel, leak=1.0 - 1.0 / tau, v_th=v_threshold)

    out = pl.pallas_call(
        kernel,
        out_shape=jax.ShapeDtypeStruct((T, mp, dp), out_dtype),
        grid_spec=pltpu.PrefetchScalarGridSpec(
            num_scalar_prefetch=0,
            grid=grid,
            in_specs=[
                pl.BlockSpec((1, tm, dp), lambda i, t: (t, i, 0)),
                pl.BlockSpec((dp, dp), lambda i, t: (0, 0)),
                pl.BlockSpec((dp, dp), lambda i, t: (0, 0)),
                pl.BlockSpec((dp, dp), lambda i, t: (0, 0)),
            ],
            out_specs=pl.BlockSpec((1, tm, dp), lambda i, t: (t, i, 0)),
            scratch_shapes=[
                pltpu.VMEM((tm, dp), jnp.float32),   # mlp1/2 LIF membrane
                pltpu.VMEM((tm, dp), jnp.float32),   # mlp3 LIF membrane
            ],
        ),
        compiler_params=pltpu.CompilerParams(
            dimension_semantics=("parallel", "arbitrary"),
            vmem_limit_bytes=vmem_limit,
        ),
    )(x3, w1t, w2t, w3t)

    return out[:, :m, :d].reshape(T, B, C, d)


if __name__ == "__main__":
    # Small shapes consistent with the module's (T, B, C, N) input, dim == N.
    T, B, C, dim = 4, 2, 8, 32
    key = jax.random.PRNGKey(0)
    kx, k1, k2, k3 = jax.random.split(key, 4)

    x = jax.random.normal(kx, (T, B, C, dim), dtype=jnp.float32)

    # Deterministic bias-free Linear weights.  Quantized to multiples of 1/256
    # in [-1, 1] (exactly representable in bf16 and f32) so the spike trains --
    # which gate on a hard threshold -- are bitwise identical between the
    # kernel and the reference regardless of MXU matmul precision mode.
    def make_w(k):
        q = jnp.round(jax.random.normal(k, (dim, dim), dtype=jnp.float32) * 64.0)
        return jnp.clip(q, -256.0, 256.0) / 256.0

    w1, w2, w3 = make_w(k1), make_w(k2), make_w(k3)

    out = spiking_mlp(x, w1, w2, w3)
    out = jax.block_until_ready(out)

    # Pure-JAX reference of the PyTorch forward.
    def lif(seq, tau=2.0, v_th=1.0):
        def step(v, xt):
            v = v * (1.0 - 1.0 / tau) + xt
            s = (v >= v_th).astype(xt.dtype)
            return v * (1.0 - s), s
        _, spikes = jax.lax.scan(step, jnp.zeros_like(seq[0]), seq)
        return spikes

    s = lif(x)                                        # mlp1_lif == mlp2_lif
    y1 = jnp.einsum("tbcn,mn->tbcm", s, w1)           # nn.Linear, bias=False
    y2 = jnp.einsum("tbcn,mn->tbcm", s, w2)
    s3 = lif(y2)                                      # mlp3_lif
    ref = jnp.einsum("tbcn,mn->tbcm", y1 * s3, w3)

    assert out.shape == ref.shape and out.dtype == ref.dtype
    max_err = float(jnp.max(jnp.abs(out - ref)))
    # Spikes, y1, y2 and s3 are exact by construction; only the final matmul
    # can differ by operand rounding across matmul precision modes.
    assert max_err < 5e-2, max_err

    print("KERNEL_OK")
</pallas_src>

<mosaic_0001>
module attributes {stable_mosaic.version = 11 : i64} {
  func.func @_mlp_kernel(%arg0: i32, %arg1: i32, %arg2: memref<1x16x128xf32, #tpu.memory_space<vmem>>, %arg3: memref<128x128xf32, #tpu.memory_space<vmem>>, %arg4: memref<128x128xf32, #tpu.memory_space<vmem>>, %arg5: memref<128x128xf32, #tpu.memory_space<vmem>>, %arg6: memref<1x16x128xf32, #tpu.memory_space<vmem>>, %arg7: memref<16x128xf32, #tpu.memory_space<vmem>>, %arg8: memref<16x128xf32, #tpu.memory_space<vmem>>) attributes {dimension_semantics = [#tpu.dimension_semantics<parallel>, #tpu.dimension_semantics<arbitrary>], iteration_bounds = array<i64: 1, 4>, scalar_prefetch = 0 : i64, scratch_operands = 2 : i64, tpu.core_type = #tpu.core_type<tc>, window_params = [{transform_indices = @transform_0, window_bounds = array<i64: 1, 16, 128>}, {pipeline_mode = #tpu.pipeline_mode<synchronous>, transform_indices = @transform_1, window_bounds = array<i64: 128, 128>}, {pipeline_mode = #tpu.pipeline_mode<synchronous>, transform_indices = @transform_2, window_bounds = array<i64: 128, 128>}, {pipeline_mode = #tpu.pipeline_mode<synchronous>, transform_indices = @transform_3, window_bounds = array<i64: 128, 128>}, {transform_indices = @transform_4, window_bounds = array<i64: 1, 16, 128>}]} {
    %c0_i32 = arith.constant 0 : i32
    %0 = arith.cmpi eq, %arg1, %c0_i32 : i32
    %1 = arith.extui %0 : i1 to i32
    %c0_i32_0 = arith.constant 0 : i32
    %2 = arith.cmpi ne, %1, %c0_i32_0 : i32
    scf.if %2 {
      %cst_28 = arith.constant 0.000000e+00 : f32
      %39 = vector.broadcast %cst_28 : f32 to vector<16x128xf32>
      %c0_29 = arith.constant 0 : index
      %c0_30 = arith.constant 0 : index
      %40 = vector.load %arg7[%c0_29, %c0_30] : memref<16x128xf32, #tpu.memory_space<vmem>>, vector<16x128xf32>
      tpu.vector_store %arg7[%c0_29, %c0_30], %39 {strides = array<i32>} : memref<16x128xf32, #tpu.memory_space<vmem>>, vector<16x128xf32>,
      %cst_31 = arith.constant 0.000000e+00 : f32
      %41 = vector.broadcast %cst_31 : f32 to vector<16x128xf32>
      %c0_32 = arith.constant 0 : index
      %c0_33 = arith.constant 0 : index
      %42 = vector.load %arg8[%c0_32, %c0_33] : memref<16x128xf32, #tpu.memory_space<vmem>>, vector<16x128xf32>
      tpu.vector_store %arg8[%c0_32, %c0_33], %41 {strides = array<i32>} : memref<16x128xf32, #tpu.memory_space<vmem>>, vector<16x128xf32>,
    } else {
    }
    %c0 = arith.constant 0 : index
    %c0_1 = arith.constant 0 : index
    %c0_2 = arith.constant 0 : index
    %3 = vector.load %arg2[%c0, %c0_1, %c0_2] : memref<1x16x128xf32, #tpu.memory_space<vmem>>, vector<1x16x128xf32>
    %4 = vector.shape_cast %3 : vector<1x16x128xf32> to vector<16x128xf32>
    %c0_3 = arith.constant 0 : index
    %c0_4 = arith.constant 0 : index
    %5 = vector.load %arg7[%c0_3, %c0_4] : memref<16x128xf32, #tpu.memory_space<vmem>>, vector<16x128xf32>
    %cst = arith.constant 5.000000e-01 : f32
    %6 = vector.broadcast %cst : f32 to vector<16x128xf32>
    %7 = arith.mulf %5, %6 : vector<16x128xf32>
    %8 = arith.addf %7, %4 : vector<16x128xf32>
    %cst_5 = arith.constant 1.000000e+00 : f32
    %9 = vector.broadcast %cst_5 : f32 to vector<16x128xf32>
    %10 = arith.cmpf oge, %8, %9 : vector<16x128xf32>
    %11 = arith.extui %10 : vector<16x128xi1> to vector<16x128xi32>
    %12 = arith.sitofp %11 : vector<16x128xi32> to vector<16x128xf32>
    %cst_6 = arith.constant 1.000000e+00 : f32
    %13 = vector.broadcast %cst_6 : f32 to vector<16x128xf32>
    %14 = arith.subf %13, %12 : vector<16x128xf32>
    %15 = arith.mulf %8, %14 : vector<16x128xf32>
    %c0_7 = arith.constant 0 : index
    %c0_8 = arith.constant 0 : index
    %16 = vector.load %arg7[%c0_7, %c0_8] : memref<16x128xf32, #tpu.memory_space<vmem>>, vector<16x128xf32>
    tpu.vector_store %arg7[%c0_7, %c0_8], %15 {strides = array<i32>} : memref<16x128xf32, #tpu.memory_space<vmem>>, vector<16x128xf32>,
    %c0_9 = arith.constant 0 : index
    %c0_10 = arith.constant 0 : index
    %17 = vector.load %arg3[%c0_9, %c0_10] : memref<128x128xf32, #tpu.memory_space<vmem>>, vector<128x128xf32>
    %c0_11 = arith.constant 0 : index
    %c0_12 = arith.constant 0 : index
    %18 = vector.load %arg4[%c0_11, %c0_12] : memref<128x128xf32, #tpu.memory_space<vmem>>, vector<128x128xf32>
    %c0_13 = arith.constant 0 : index
    %c0_14 = arith.constant 0 : index
    %19 = vector.load %arg5[%c0_13, %c0_14] : memref<128x128xf32, #tpu.memory_space<vmem>>, vector<128x128xf32>
    %cst_15 = arith.constant dense<0.000000e+00> : vector<16x128xf32>
    %20 = tpu.matmul %12, %17, %cst_15 {dimension_numbers = #tpu.dot_dimension_numbers<[1], [0], [0], [1], [0, 0, 1, 1], [], []>} : vector<16x128xf32>, vector<128x128xf32>, vector<16x128xf32> -> vector<16x128xf32>
    %cst_16 = arith.constant dense<0.000000e+00> : vector<16x128xf32>
    %21 = tpu.matmul %12, %18, %cst_16 {dimension_numbers = #tpu.dot_dimension_numbers<[1], [0], [0], [1], [0, 0, 1, 1], [], []>} : vector<16x128xf32>, vector<128x128xf32>, vector<16x128xf32> -> vector<16x128xf32>
    %c0_17 = arith.constant 0 : index
    %c0_18 = arith.constant 0 : index
    %22 = vector.load %arg8[%c0_17, %c0_18] : memref<16x128xf32, #tpu.memory_space<vmem>>, vector<16x128xf32>
    %cst_19 = arith.constant 5.000000e-01 : f32
    %23 = vector.broadcast %cst_19 : f32 to vector<16x128xf32>
    %24 = arith.mulf %22, %23 : vector<16x128xf32>
    %25 = arith.addf %24, %21 : vector<16x128xf32>
    %cst_20 = arith.constant 1.000000e+00 : f32
    %26 = vector.broadcast %cst_20 : f32 to vector<16x128xf32>
    %27 = arith.cmpf oge, %25, %26 : vector<16x128xf32>
    %28 = arith.extui %27 : vector<16x128xi1> to vector<16x128xi32>
    %29 = arith.sitofp %28 : vector<16x128xi32> to vector<16x128xf32>
    %cst_21 = arith.constant 1.000000e+00 : f32
    %30 = vector.broadcast %cst_21 : f32 to vector<16x128xf32>
    %31 = arith.subf %30, %29 : vector<16x128xf32>
    %32 = arith.mulf %25, %31 : vector<16x128xf32>
    %c0_22 = arith.constant 0 : index
    %c0_23 = arith.constant 0 : index
    %33 = vector.load %arg8[%c0_22, %c0_23] : memref<16x128xf32, #tpu.memory_space<vmem>>, vector<16x128xf32>
    tpu.vector_store %arg8[%c0_22, %c0_23], %32 {strides = array<i32>} : memref<16x128xf32, #tpu.memory_space<vmem>>, vector<16x128xf32>,
    %34 = arith.mulf %20, %29 : vector<16x128xf32>
    %cst_24 = arith.constant dense<0.000000e+00> : vector<16x128xf32>
    %35 = tpu.matmul %34, %19, %cst_24 {dimension_numbers = #tpu.dot_dimension_numbers<[1], [0], [0], [1], [0, 0, 1, 1], [], []>} : vector<16x128xf32>, vector<128x128xf32>, vector<16x128xf32> -> vector<16x128xf32>
    %c0_25 = arith.constant 0 : index
    %c0_26 = arith.constant 0 : index
    %c0_27 = arith.constant 0 : index
    %36 = vector.load %arg6[%c0_25, %c0_26, %c0_27] : memref<1x16x128xf32, #tpu.memory_space<vmem>>, vector<1x16x128xf32>
    %37 = vector.shape_cast %36 : vector<1x16x128xf32> to vector<16x128xf32>
    %38 = vector.shape_cast %35 : vector<16x128xf32> to vector<1x16x128xf32>
    tpu.vector_store %arg6[%c0_25, %c0_26, %c0_27], %38 {strides = array<i32>} : memref<1x16x128xf32, #tpu.memory_space<vmem>>, vector<1x16x128xf32>,
    return
  }
  func.func @transform_0(%arg0: i32, %arg1: i32) -> (i32, i32, i32) {
    %c0_i32 = arith.constant 0 : i32
    %c0_i32_0 = arith.constant 0 : i32
    return %arg1, %arg0, %c0_i32 : i32, i32, i32
  }
  func.func @transform_1(%arg0: i32, %arg1: i32) -> (i32, i32) {
    %c0_i32 = arith.constant 0 : i32
    %c0_i32_0 = arith.constant 0 : i32
    %c0_i32_1 = arith.constant 0 : i32
    return %c0_i32, %c0_i32_0 : i32, i32
  }
  func.func @transform_2(%arg0: i32, %arg1: i32) -> (i32, i32) {
    %c0_i32 = arith.constant 0 : i32
    %c0_i32_0 = arith.constant 0 : i32
    %c0_i32_1 = arith.constant 0 : i32
    return %c0_i32, %c0_i32_0 : i32, i32
  }
  func.func @transform_3(%arg0: i32, %arg1: i32) -> (i32, i32) {
    %c0_i32 = arith.constant 0 : i32
    %c0_i32_0 = arith.constant 0 : i32
    %c0_i32_1 = arith.constant 0 : i32
    return %c0_i32, %c0_i32_0 : i32, i32
  }
  func.func @transform_4(%arg0: i32, %arg1: i32) -> (i32, i32, i32) {
    %c0_i32 = arith.constant 0 : i32
    %c0_i32_0 = arith.constant 0 : i32
    return %arg1, %arg0, %c0_i32 : i32, i32, i32
  }
}

</mosaic_0001>

<llo_original>
// kernel: tpu_custom_call.1
$region0: #{tpu_custom_call.1}
  #allocation0 [shape = 'u32[]', space=smem, size = 0x4, offset = 0x4, fixed_abs, tag = 'smem constant byte address 0x4 - core index']
  #allocation1 [shape = 'u32[144,128]{1,0:T(1,128)}', space=vmem, size = 0x12000, scoped, tag = 'internal scratch']
  #allocation2 [shape = 'f32[16,128]{1,0:T(8,128)}', space=vmem, size = 0x2000, scoped, tag = 'scratch operand']
  #allocation3 [shape = 'f32[16,128]{1,0:T(8,128)}', space=vmem, size = 0x2000, scoped, tag = 'scratch operand']
  %s0 = inlined_call_operand.hbm [shape: f32[4,16,128], index: 0, kind: input, shape index: {}]
  %s1 = inlined_call_operand.hbm [shape: f32[128,128], index: 1, kind: input, shape index: {}]
  %s2 = inlined_call_operand.hbm [shape: f32[128,128], index: 2, kind: input, shape index: {}]
  %s3 = inlined_call_operand.hbm [shape: f32[128,128], index: 3, kind: input, shape index: {}]
  %s4 = inlined_call_operand.hbm [shape: f32[4,16,128], index: 4, kind: output, shape index: {}]
  %s5 = sld [smem:[#allocation0]]
  $region69: #{tpu_custom_call.1} parent=0
    _
  %s7 = ssub.s32 1, %s5
  %s8 = scalar_select 0, %s7, %s5
  $region1: #{tpu_custom_call.1} parent=0
    #allocation4 [shape = 'u8[16384]{0}', space=vmem, size = 0x4000, scoped, tag = 'input window, operand 0']
    #allocation5 [shape = 's32[2]{0}', space=sflag, size = 0x8, scoped, tag = 'scoped memory for tpu_custom_call.1']
    #allocation6 [shape = 's32[2]{0}', space=sflag, size = 0x8, scoped, tag = 'scoped memory for tpu_custom_call.1']
    #allocation7 [shape = 'u8[65536]{0}', space=vmem, size = 0x10000, scoped, tag = 'input window, operand 1, single buffered']
    #allocation8 [shape = 's32[1]{0}', space=sflag, size = 0x4, scoped, tag = 'scoped memory for tpu_custom_call.1']
    #allocation9 [shape = 'u8[65536]{0}', space=vmem, size = 0x10000, scoped, tag = 'input window, operand 2, single buffered']
    #allocation10 [shape = 'u8[65536]{0}', space=vmem, size = 0x10000, scoped, tag = 'input window, operand 3, single buffered']
    #allocation11 [shape = 's32[1]{0}', space=sflag, size = 0x4, scoped, tag = 'scoped memory for tpu_custom_call.1']
    #allocation12 [shape = 'u8[16384]{0}', space=vmem, size = 0x4000, scoped, tag = 'output window, operand 0']
    %9 = vsyncpa [#allocation5], 0
    %s10 = scalar_lea.sflag [#allocation5], 1
    %11 = vsyncpa %s10, 0
    %12 = vsyncpa [#allocation8], 0
    %13 = vsyncpa [#allocation11], 0
    %14 = vsyncpa [#allocation6], 0
    %s15 = scalar_lea.sflag [#allocation6], 1
    %16 = vsyncpa %s15, 0
    loop: start=0, step=1, limit=6
    $region2: #{tpu_custom_call.1} parent=1 // loop_pre_header
      _
    $region3: #{tpu_custom_call.1} parent=1 // loop_header
      %s18 = sphi 0, %s22
      %p19 = scmp.ge.s32.totalorder %s18, 6
      %s25 = sphi 0, %s37
      %s26 = sphi 0, %s33
      %s27 = sphi 0, %s25
      %s28 = sphi 0, %s26
      %s29 = sphi 0, %s27
      %s30 = sphi 0, %s28
      %s42 = sphi 0, %s44
      %s45 = sphi 0, %s42
      %s46 = sphi 0, %s45
      %s62 = sphi 0, %s46
      %s66 = sphi 0, %s66
      %s68 = sphi 0, %s66
      %s69 = sphi 0, %s68
      %s83 = sphi 0, %s69
      %s87 = sphi 0, %s87
      %s89 = sphi 0, %s87
      %s90 = sphi 0, %s89
      %s104 = sphi 0, %s90
      %s108 = sphi 0, %s108
      %s110 = sphi 0, %s108
      %s111 = sphi 0, %s110
      %s125 = sphi 0, %s111
      %s133 = sphi 0, %s135
      %s136 = sphi 0, %s133
      %s137 = sphi 0, %s136
      %s153 = sphi 0, %s137
    $region4: #{tpu_custom_call.1} parent=1 // loop_header_branch
      %21 = sbr.rel (%p19) target = $region8
    $region5: #{tpu_custom_call.1} parent=1 // loop_body
      %s23 = ssub.s32 %s18, 1
      %s24 = ssub.s32 %s18, 2
      %s31 = sadd.s32 1, %s26
      %p32 = scmp.ge.s32.totalorder %s31, 4
      %s33 = scalar_select %p32, 0, %s31
      %s34 = sadd.s32 1, %s25
      %s35 = scalar_select %p32, %s34, %s25
      %p36 = scmp.ge.s32.totalorder %s35, 1
      %s37 = scalar_select %p36, 0, %s35
      %s38 = ssub.s32 %s26, %s33
      %s39 = ssub.s32 %s25, %s37
      %s40 = sor.u32 %s38, %s39
      %p41 = scmp.eq.s32.totalorder %s40, 0
      %s43 = sadd.s32 %s42, 1
      %s44 = scalar_select %p41, %s42, %s43
      %p47 = pneg %p41
      %p48 = scmp.eq.s32.totalorder %s18, 3
      %p49 = por %p47, %p48
      %p50 = scmp.ne.s32.totalorder %s42, %s45
      %p51 = scmp.eq.s32.totalorder %s18, 0
      %p52 = por %p50, %p51
      %p53 = scmp.ne.s32.totalorder %s42, %s45
      %p54 = scmp.eq.s32.totalorder %s23, 3
      %p55 = por %p53, %p54
      %p56 = scmp.ne.s32.totalorder %s45, %s46
      %p57 = scmp.eq.s32.totalorder %s23, 0
      %p58 = por %p56, %p57
      %p59 = scmp.ne.s32.totalorder %s45, %s46
      %p60 = scmp.eq.s32.totalorder %s24, 3
      %p61 = por %p59, %p60
      %p63 = scmp.ne.s32.totalorder %s46, %s62
      %p64 = scmp.eq.s32.totalorder %s24, 0
      %p65 = por %p63, %p64
      %s67 = sadd.s32 %s66, 1
      %p70 = scmp.eq.s32.totalorder %s18, 3
      %p71 = scmp.ne.s32.totalorder %s66, %s68
      %p72 = scmp.eq.s32.totalorder %s18, 0
      %p73 = por %p71, %p72
      %p74 = scmp.ne.s32.totalorder %s66, %s68
      %p75 = scmp.eq.s32.totalorder %s23, 3
      %p76 = por %p74, %p75
      %p77 = scmp.ne.s32.totalorder %s68, %s69
      %p78 = scmp.eq.s32.totalorder %s23, 0
      %p79 = por %p77, %p78
      %p80 = scmp.ne.s32.totalorder %s68, %s69
      %p81 = scmp.eq.s32.totalorder %s24, 3
      %p82 = por %p80, %p81
      %p84 = scmp.ne.s32.totalorder %s69, %s83
      %p85 = scmp.eq.s32.totalorder %s24, 0
      %p86 = por %p84, %p85
      %s88 = sadd.s32 %s87, 1
      %p91 = scmp.eq.s32.totalorder %s18, 3
      %p92 = scmp.ne.s32.totalorder %s87, %s89
      %p93 = scmp.eq.s32.totalorder %s18, 0
      %p94 = por %p92, %p93
      %p95 = scmp.ne.s32.totalorder %s87, %s89
      %p96 = scmp.eq.s32.totalorder %s23, 3
      %p97 = por %p95, %p96
      %p98 = scmp.ne.s32.totalorder %s89, %s90
      %p99 = scmp.eq.s32.totalorder %s23, 0
      %p100 = por %p98, %p99
      %p101 = scmp.ne.s32.totalorder %s89, %s90
      %p102 = scmp.eq.s32.totalorder %s24, 3
      %p103 = por %p101, %p102
      %p105 = scmp.ne.s32.totalorder %s90, %s104
      %p106 = scmp.eq.s32.totalorder %s24, 0
      %p107 = por %p105, %p106
      %s109 = sadd.s32 %s108, 1
      %p112 = scmp.eq.s32.totalorder %s18, 3
      %p113 = scmp.ne.s32.totalorder %s108, %s110
      %p114 = scmp.eq.s32.totalorder %s18, 0
      %p115 = por %p113, %p114
      %p116 = scmp.ne.s32.totalorder %s108, %s110
      %p117 = scmp.eq.s32.totalorder %s23, 3
      %p118 = por %p116, %p117
      %p119 = scmp.ne.s32.totalorder %s110, %s111
      %p120 = scmp.eq.s32.totalorder %s23, 0
      %p121 = por %p119, %p120
      %p122 = scmp.ne.s32.totalorder %s110, %s111
      %p123 = scmp.eq.s32.totalorder %s24, 3
      %p124 = por %p122, %p123
      %p126 = scmp.ne.s32.totalorder %s111, %s125
      %p127 = scmp.eq.s32.totalorder %s24, 0
      %p128 = por %p126, %p127
      %s129 = ssub.s32 %s26, %s33
      %s130 = ssub.s32 %s25, %s37
      %s131 = sor.u32 %s129, %s130
      %p132 = scmp.eq.s32.totalorder %s131, 0
      %s134 = sadd.s32 %s133, 1
      %s135 = scalar_select %p132, %s133, %s134
      %p138 = pneg %p132
      %p139 = scmp.eq.s32.totalorder %s18, 3
      %p140 = por %p138, %p139
      %p141 = scmp.ne.s32.totalorder %s133, %s136
      %p142 = scmp.eq.s32.totalorder %s18, 0
      %p143 = por %p141, %p142
      %p144 = scmp.ne.s32.totalorder %s133, %s136
      %p145 = scmp.eq.s32.totalorder %s23, 3
      %p146 = por %p144, %p145
      %p147 = scmp.ne.s32.totalorder %s136, %s137
      %p148 = scmp.eq.s32.totalorder %s23, 0
      %p149 = por %p147, %p148
      %p150 = scmp.ne.s32.totalorder %s136, %s137
      %p151 = scmp.eq.s32.totalorder %s24, 3
      %p152 = por %p150, %p151
      %p154 = scmp.ne.s32.totalorder %s137, %s153
      %p155 = scmp.eq.s32.totalorder %s24, 0
      %p156 = por %p154, %p155
      %p157 = scmp.le.s32.totalorder 1, %s18
      %p158 = scmp.lt.s32.totalorder %s18, 5
      %p159 = pnand %p157, %p158
      %p160 = pneg %p159
      // Predicated region
      $region9: #{tpu_custom_call.1} parent=5 // pred_check
        _
      $region10: #{tpu_custom_call.1} parent=5 // pred_check_branch
        %162 = sbr.rel (%p159) target = $region12
      $region11: #{tpu_custom_call.1} parent=5 // pred_region
        %s163 = ssub.s32 %s18, 1
        // Predicated region
        $region13: #{tpu_custom_call.1} parent=11 // pred_check
          %p164 = pneg %p79
        $region14: #{tpu_custom_call.1} parent=11 // pred_check_branch
          %166 = sbr.rel (%p164) target = $region16
        $region15: #{tpu_custom_call.1} parent=11 // pred_region
          %s168 = ssub.s32 2048, 2048
          %169 = vsyncadd [#allocation8], %s168
          %s170 = sshll.u32 [#allocation7], 4
          %s171 = int_to_ptr.vmem [resolvable:$true] %s170
          %176 = dma.hbm_to_vmem [thread:$0]  %s1, 2048, %s171, [#allocation8], 128, 128, 8
        $region16: #{tpu_custom_call.1} parent=11 // pred_fallthru
          _
        // Predicated region
        $region17: #{tpu_custom_call.1} parent=11 // pred_check
          %p177 = pneg %p100
        $region18: #{tpu_custom_call.1} parent=11 // pred_check_branch
          %179 = sbr.rel (%p177) target = $region20
        $region19: #{tpu_custom_call.1} parent=11 // pred_region
          %s181 = ssub.s32 2048, 2048
          %182 = vsyncadd [#allocation8], %s181
          %s183 = sshll.u32 [#allocation9], 4
          %s184 = int_to_ptr.vmem [resolvable:$true] %s183
          %189 = dma.hbm_to_vmem [thread:$0]  %s2, 2048, %s184, [#allocation8], 128, 128, 8
        $region20: #{tpu_custom_call.1} parent=11 // pred_fallthru
          _
        // Predicated region
        $region21: #{tpu_custom_call.1} parent=11 // pred_check
          %p190 = pneg %p121
        $region22: #{tpu_custom_call.1} parent=11 // pred_check_branch
          %192 = sbr.rel (%p190) target = $region24
        $region23: #{tpu_custom_call.1} parent=11 // pred_region
          %s194 = ssub.s32 2048, 2048
          %195 = vsyncadd [#allocation11], %s194
          %s196 = sshll.u32 [#allocation10], 4
          %s197 = int_to_ptr.vmem [resolvable:$true] %s196
          %202 = dma.hbm_to_vmem [thread:$0]  %s3, 2048, %s197, [#allocation11], 128, 128, 8
        $region24: #{tpu_custom_call.1} parent=11 // pred_fallthru
          _
      $region12: #{tpu_custom_call.1} parent=5 // pred_fallthru
        _
      %p203 = scmp.lt.s32.totalorder %s18, 4
      // Predicated region
      $region25: #{tpu_custom_call.1} parent=5 // pred_check
        %p204 = pneg %p203
      $region26: #{tpu_custom_call.1} parent=5 // pred_check_branch
        %206 = sbr.rel (%p204) target = $region28
      $region27: #{tpu_custom_call.1} parent=5 // pred_region
        // Predicated region
        $region29: #{tpu_custom_call.1} parent=27 // pred_check
          %p207 = pneg %p52
        $region30: #{tpu_custom_call.1} parent=27 // pred_check_branch
          %209 = sbr.rel (%p207) target = $region32
        $region31: #{tpu_custom_call.1} parent=27 // pred_region
          %s210 = sand.u32 %s42, 1
          %s211 = scalar_lea.sflag [#allocation5], %s210
          %s212 = sand.u32 %s42, 1
          %s213 = smul.addr %s212, 16
          %s214 = scalar_lea.vmem [#allocation4], %s213
          %s215 = smul.u32 2, %s25
          %s217 = ssub.s32 256, 256
          %218 = vsyncadd %s211, %s217
          %s219 = smul.addr %s26, 2
          %s220 = sadd.s32 %s215, %s219
          %s221 = smul.addr %s220, 128
          %s222 = scalar_lea.hbm %s0, %s221
          %s223 = sshll.u32 %s214, 4
          %s224 = int_to_ptr.vmem [resolvable:$true] %s223
          %229 = dma.hbm_to_vmem [thread:$0]  %s222, 256, %s224, %s211, 128, 128, 8
        $region32: #{tpu_custom_call.1} parent=27 // pred_fallthru
          _
      $region28: #{tpu_custom_call.1} parent=5 // pred_fallthru
        _
      %p230 = scmp.le.s32.totalorder 1, %s18
      %p231 = scmp.lt.s32.totalorder %s18, 5
      %p232 = pnand %p230, %p231
      %p233 = pneg %p232
      // Predicated region
      $region33: #{tpu_custom_call.1} parent=5 // pred_check
        _
      $region34: #{tpu_custom_call.1} parent=5 // pred_check_branch
        %235 = sbr.rel (%p232) target = $region36
      $region35: #{tpu_custom_call.1} parent=5 // pred_region
        %s236 = ssub.s32 %s18, 1
        %s237 = sand.u32 %s45, 1
        %s238 = scalar_lea.sflag [#allocation5], %s237
        %s239 = sand.u32 %s45, 1
        %s240 = smul.addr %s239, 16
        %s241 = scalar_lea.vmem [#allocation4], %s240
        // Predicated region
        $region37: #{tpu_custom_call.1} parent=35 // pred_check
          %p242 = pneg %p58
        $region38: #{tpu_custom_call.1} parent=35 // pred_check_branch
          %244 = sbr.rel (%p242) target = $region40
        $region39: #{tpu_custom_call.1} parent=35 // pred_region
          %245 = dma.done %s238, 256
        $region40: #{tpu_custom_call.1} parent=35 // pred_fallthru
          _
        // Predicated region
        $region41: #{tpu_custom_call.1} parent=35 // pred_check
          %p246 = pneg %p79
        $region42: #{tpu_custom_call.1} parent=35 // pred_check_branch
          %248 = sbr.rel (%p246) target = $region44
        $region43: #{tpu_custom_call.1} parent=35 // pred_region
          %249 = dma.done [#allocation8], 2048
        $region44: #{tpu_custom_call.1} parent=35 // pred_fallthru
          _
        // Predicated region
        $region45: #{tpu_custom_call.1} parent=35 // pred_check
          %p250 = pneg %p100
        $region46: #{tpu_custom_call.1} parent=35 // pred_check_branch
          %252 = sbr.rel (%p250) target = $region48
        $region47: #{tpu_custom_call.1} parent=35 // pred_region
          %253 = dma.done [#allocation8], 2048
        $region48: #{tpu_custom_call.1} parent=35 // pred_fallthru
          _
        // Predicated region
        $region49: #{tpu_custom_call.1} parent=35 // pred_check
          %p254 = pneg %p121
        $region50: #{tpu_custom_call.1} parent=35 // pred_check_branch
          %256 = sbr.rel (%p254) target = $region52
        $region51: #{tpu_custom_call.1} parent=35 // pred_region
          %257 = dma.done [#allocation11], 2048
        $region52: #{tpu_custom_call.1} parent=35 // pred_fallthru
          _
        %s258 = sand.u32 %s45, 1
        %s259 = scalar_lea.sflag [#allocation5], %s258
        %s260 = sand.u32 %s45, 1
        %s261 = smul.addr %s260, 16
        %s262 = scalar_lea.vmem [#allocation4], %s261
        %p263 = pneg %p58
        %p264 = pneg %p55
        %p265 = pneg %p79
        %p266 = pneg %p76
        %p267 = pneg %p100
        %p268 = pneg %p97
        %p269 = pneg %p121
        %p270 = pneg %p118
        %p271 = pneg %p149
        %p272 = pneg %p146
        %s273 = sand.u32 %s136, 1
        %s274 = scalar_lea.sflag [#allocation6], %s273
        %s275 = sand.u32 %s136, 1
        %s276 = smul.addr %s275, 16
        %s277 = scalar_lea.vmem [#allocation12], %s276
        %s278 = smul.u32 2, %s27
        %s279 = smul.u32 2, %s27
        %p280 = scmp.eq.s32.totalorder %s28, 0
        // Predicated region
        $region53: #{tpu_custom_call.1} parent=35 // pred_check
          %p281 = pneg %p280
        $region54: #{tpu_custom_call.1} parent=35 // pred_check_branch
          %283 = sbr.rel (%p281) target = $region56
        $region55: #{tpu_custom_call.1} parent=35 // pred_region
          %284 = vst [vmem:[#allocation2] sm:$0xff] 0.0
          %285 = vst [vmem:[#allocation2 + $0x8] sm:$0xff] 0.0
          %286 = vst [vmem:[#allocation3] sm:$0xff] 0.0
          %287 = vst [vmem:[#allocation3 + $0x8] sm:$0xff] 0.0
        $region56: #{tpu_custom_call.1} parent=35 // pred_fallthru
          _
        %v288 = vld [vmem:[%s241] sm:$0xff]
        %v289 = vld [vmem:[%s241 + $0x8] sm:$0xff]
        %v290 = vld [vmem:[#allocation2] sm:$0xff]
        %v291 = vld [vmem:[#allocation2 + $0x8] sm:$0xff]
        %v292 = vmul.f32 %v290, 0.5
        %v293 = vmul.f32 %v291, 0.5
        %v294 = vadd.f32 %v292, %v288
        %v295 = vadd.f32 %v293, %v289
        %vm296 = vcmp.ge.f32.partialorder %v294, 1.0
        %vm297 = vcmp.ge.f32.partialorder %v295, 1.0
        %v298 = vsel %vm296, 1, 0
        %v299 = vsel %vm297, 1, 0
        %v300 = vcvt.s32.f32 %v298
        %v301 = vcvt.s32.f32 %v299
        %v302 = vsub.f32 1.0, %v300
        %v303 = vsub.f32 1.0, %v301
        %v304 = vmul.f32 %v294, %v302
        %v305 = vmul.f32 %v295, %v303
        %306 = vst [vmem:[#allocation2] sm:$0xff] %v304
        %307 = vst [vmem:[#allocation2 + $0x8] sm:$0xff] %v305
        %v308 = vld [vmem:[#allocation7] sm:$0xff]
        %v309 = vld [vmem:[#allocation7 + $0x8] sm:$0xff]
        %v310 = vld [vmem:[#allocation7 + $0x10] sm:$0xff]
        %v311 = vld [vmem:[#allocation7 + $0x18] sm:$0xff]
        %v312 = vld [vmem:[#allocation7 + $0x20] sm:$0xff]
        %v313 = vld [vmem:[#allocation7 + $0x28] sm:$0xff]
        %v314 = vld [vmem:[#allocation7 + $0x30] sm:$0xff]
        %v315 = vld [vmem:[#allocation7 + $0x38] sm:$0xff]
        %v316 = vld [vmem:[#allocation7 + $0x40] sm:$0xff]
        %v317 = vld [vmem:[#allocation7 + $0x48] sm:$0xff]
        %v318 = vld [vmem:[#allocation7 + $0x50] sm:$0xff]
        %v319 = vld [vmem:[#allocation7 + $0x58] sm:$0xff]
        %v320 = vld [vmem:[#allocation7 + $0x60] sm:$0xff]
        %v321 = vld [vmem:[#allocation7 + $0x68] sm:$0xff]
        %v322 = vld [vmem:[#allocation7 + $0x70] sm:$0xff]
        %v323 = vld [vmem:[#allocation7 + $0x78] sm:$0xff]
        %v324 = vld [vmem:[#allocation9] sm:$0xff]
        %v325 = vld [vmem:[#allocation9 + $0x8] sm:$0xff]
        %v326 = vld [vmem:[#allocation9 + $0x10] sm:$0xff]
        %v327 = vld [vmem:[#allocation9 + $0x18] sm:$0xff]
        %v328 = vld [vmem:[#allocation9 + $0x20] sm:$0xff]
        %v329 = vld [vmem:[#allocation9 + $0x28] sm:$0xff]
        %v330 = vld [vmem:[#allocation9 + $0x30] sm:$0xff]
        %v331 = vld [vmem:[#allocation9 + $0x38] sm:$0xff]
        %v332 = vld [vmem:[#allocation9 + $0x40] sm:$0xff]
        %v333 = vld [vmem:[#allocation9 + $0x48] sm:$0xff]
        %v334 = vld [vmem:[#allocation9 + $0x50] sm:$0xff]
        %v335 = vld [vmem:[#allocation9 + $0x58] sm:$0xff]
        %v336 = vld [vmem:[#allocation9 + $0x60] sm:$0xff]
        %v337 = vld [vmem:[#allocation9 + $0x68] sm:$0xff]
        %v338 = vld [vmem:[#allocation9 + $0x70] sm:$0xff]
        %v339 = vld [vmem:[#allocation9 + $0x78] sm:$0xff]
        %v340 = vld [vmem:[#allocation10] sm:$0xff]
        %v341 = vld [vmem:[#allocation10 + $0x8] sm:$0xff]
        %v342 = vld [vmem:[#allocation10 + $0x10] sm:$0xff]
        %v343 = vld [vmem:[#allocation10 + $0x18] sm:$0xff]
        %v344 = vld [vmem:[#allocation10 + $0x20] sm:$0xff]
        %v345 = vld [vmem:[#allocation10 + $0x28] sm:$0xff]
        %v346 = vld [vmem:[#allocation10 + $0x30] sm:$0xff]
        %v347 = vld [vmem:[#allocation10 + $0x38] sm:$0xff]
        %v348 = vld [vmem:[#allocation10 + $0x40] sm:$0xff]
        %v349 = vld [vmem:[#allocation10 + $0x48] sm:$0xff]
        %v350 = vld [vmem:[#allocation10 + $0x50] sm:$0xff]
        %v351 = vld [vmem:[#allocation10 + $0x58] sm:$0xff]
        %v352 = vld [vmem:[#allocation10 + $0x60] sm:$0xff]
        %v353 = vld [vmem:[#allocation10 + $0x68] sm:$0xff]
        %v354 = vld [vmem:[#allocation10 + $0x70] sm:$0xff]
        %v355 = vld [vmem:[#allocation10 + $0x78] sm:$0xff]
        %356 = vmatprep.subr.mxu0 0.0
        %357 = vmatpush1.msra.mxu0 %v323
        %358 = vmatprep.subr.mxu0 0.0
        %359 = vmatpush1.msra.mxu0 %v322
        %360 = vmatprep.subr.mxu0 0.0
        %361 = vmatpush1.msra.mxu0 %v321
        %362 = vmatprep.subr.mxu0 0.0
        %363 = vmatpush1.msra.mxu0 %v320
        %364 = vmatprep.subr.mxu0 0.0
        %365 = vmatpush1.msra.mxu0 %v319
        %366 = vmatprep.subr.mxu0 0.0
        %367 = vmatpush1.msra.mxu0 %v318
        %368 = vmatprep.subr.mxu0 0.0
        %369 = vmatpush1.msra.mxu0 %v317
        %370 = vmatprep.subr.mxu0 0.0
        %371 = vmatpush1.msra.mxu0 %v316
        %372 = vmatprep.subr.mxu0 0.0
        %373 = vmatpush1.msra.mxu0 %v315
        %374 = vmatprep.subr.mxu0 0.0
        %375 = vmatpush1.msra.mxu0 %v314
        %376 = vmatprep.subr.mxu0 0.0
        %377 = vmatpush1.msra.mxu0 %v313
        %378 = vmatprep.subr.mxu0 0.0
        %379 = vmatpush1.msra.mxu0 %v312
        %380 = vmatprep.subr.mxu0 0.0
        %381 = vmatpush1.msra.mxu0 %v311
        %382 = vmatprep.subr.mxu0 0.0
        %383 = vmatpush1.msra.mxu0 %v310
        %384 = vmatprep.subr.mxu0 0.0
        %385 = vmatpush1.msra.mxu0 %v309
        %386 = vmatprep.subr.mxu0 0.0
        %387 = vmatpush1.msra.mxu0 %v308
        %388 = vmatprep.subr.mxu0 0.0
        %389 = vmatpush2.msra.mxu0 0.0
        %390 = vmatprep.subr.mxu0 0.0
        %391 = vmatpush2.msra.mxu0 0.0
        %392 = vmatprep.subr.mxu0 0.0
        %393 = vmatpush2.msra.mxu0 0.0
        %394 = vmatprep.subr.mxu0 0.0
        %395 = vmatpush2.msra.mxu0 0.0
        %396 = vmatprep.subr.mxu0 0.0
        %397 = vmatpush2.msra.mxu0 0.0
        %398 = vmatprep.subr.mxu0 0.0
        %399 = vmatpush2.msra.mxu0 0.0
        %400 = vmatprep.subr.mxu0 0.0
        %401 = vmatpush2.msra.mxu0 0.0
        %402 = vmatprep.subr.mxu0 0.0
        %403 = vmatpush2.msra.mxu0 0.0
        %404 = vmatprep.subr.mxu0 0.0
        %405 = vmatpush2.msra.mxu0 0.0
        %406 = vmatprep.subr.mxu0 0.0
        %407 = vmatpush2.msra.mxu0 0.0
        %408 = vmatprep.subr.mxu0 0.0
        %409 = vmatpush2.msra.mxu0 0.0
        %410 = vmatprep.subr.mxu0 0.0
        %411 = vmatpush2.msra.mxu0 0.0
        %412 = vmatprep.subr.mxu0 0.0
        %413 = vmatpush2.msra.mxu0 0.0
        %414 = vmatprep.subr.mxu0 0.0
        %415 = vmatpush2.msra.mxu0 0.0
        %416 = vmatprep.subr.mxu0 0.0
        %417 = vmatpush2.msra.mxu0 0.0
        %418 = vmatprep.subr.mxu0 0.0
        %419 = vmatpush2.msra.mxu0 0.0
        %420 = vmatprep.mubr.f32.mxu0 0.0
        %421 = vmatmul.mubr.f32.gmra.mxu0 %v300
        %v422 = vpop.f32.mrf.mxu0
        %v423 = vadd.f32 0.0, %v422
        %v424 = vpop.f32.mrf.mxu0
        %425 = vmatprep.mubr.f32.mxu0 0.0
        %426 = vmatmul.mubr.f32.gmra.mxu0 %v301
        %v427 = vpop.f32.mrf.mxu0
        %v428 = vadd.f32 0.0, %v427
        %v429 = vpop.f32.mrf.mxu0
        %430 = vdwg.mxu0
        %431 = vmatprep.subr.mxu0 0.0
        %432 = vmatpush1.msra.mxu0 %v339
        %433 = vmatprep.subr.mxu0 0.0
        %434 = vmatpush1.msra.mxu0 %v338
        %435 = vmatprep.subr.mxu0 0.0
        %436 = vmatpush1.msra.mxu0 %v337
        %437 = vmatprep.subr.mxu0 0.0
        %438 = vmatpush1.msra.mxu0 %v336
        %439 = vmatprep.subr.mxu0 0.0
        %440 = vmatpush1.msra.mxu0 %v335
        %441 = vmatprep.subr.mxu0 0.0
        %442 = vmatpush1.msra.mxu0 %v334
        %443 = vmatprep.subr.mxu0 0.0
        %444 = vmatpush1.msra.mxu0 %v333
        %445 = vmatprep.subr.mxu0 0.0
        %446 = vmatpush1.msra.mxu0 %v332
        %447 = vmatprep.subr.mxu0 0.0
        %448 = vmatpush1.msra.mxu0 %v331
        %449 = vmatprep.subr.mxu0 0.0
        %450 = vmatpush1.msra.mxu0 %v330
        %451 = vmatprep.subr.mxu0 0.0
        %452 = vmatpush1.msra.mxu0 %v329
        %453 = vmatprep.subr.mxu0 0.0
        %454 = vmatpush1.msra.mxu0 %v328
        %455 = vmatprep.subr.mxu0 0.0
        %456 = vmatpush1.msra.mxu0 %v327
        %457 = vmatprep.subr.mxu0 0.0
        %458 = vmatpush1.msra.mxu0 %v326
        %459 = vmatprep.subr.mxu0 0.0
        %460 = vmatpush1.msra.mxu0 %v325
        %461 = vmatprep.subr.mxu0 0.0
        %462 = vmatpush1.msra.mxu0 %v324
        %463 = vmatprep.subr.mxu0 0.0
        %464 = vmatpush2.msra.mxu0 0.0
        %465 = vmatprep.subr.mxu0 0.0
        %466 = vmatpush2.msra.mxu0 0.0
        %467 = vmatprep.subr.mxu0 0.0
        %468 = vmatpush2.msra.mxu0 0.0
        %469 = vmatprep.subr.mxu0 0.0
        %470 = vmatpush2.msra.mxu0 0.0
        %471 = vmatprep.subr.mxu0 0.0
        %472 = vmatpush2.msra.mxu0 0.0
        %473 = vmatprep.subr.mxu0 0.0
        %474 = vmatpush2.msra.mxu0 0.0
        %475 = vmatprep.subr.mxu0 0.0
        %476 = vmatpush2.msra.mxu0 0.0
        %477 = vmatprep.subr.mxu0 0.0
        %478 = vmatpush2.msra.mxu0 0.0
        %479 = vmatprep.subr.mxu0 0.0
        %480 = vmatpush2.msra.mxu0 0.0
        %481 = vmatprep.subr.mxu0 0.0
        %482 = vmatpush2.msra.mxu0 0.0
        %483 = vmatprep.subr.mxu0 0.0
        %484 = vmatpush2.msra.mxu0 0.0
        %485 = vmatprep.subr.mxu0 0.0
        %486 = vmatpush2.msra.mxu0 0.0
        %487 = vmatprep.subr.mxu0 0.0
        %488 = vmatpush2.msra.mxu0 0.0
        %489 = vmatprep.subr.mxu0 0.0
        %490 = vmatpush2.msra.mxu0 0.0
        %491 = vmatprep.subr.mxu0 0.0
        %492 = vmatpush2.msra.mxu0 0.0
        %493 = vmatprep.subr.mxu0 0.0
        %494 = vmatpush2.msra.mxu0 0.0
        %495 = vmatprep.mubr.f32.mxu0 0.0
        %496 = vmatmul.mubr.f32.gmra.mxu0 %v300
        %v497 = vpop.f32.mrf.mxu0
        %v498 = vadd.f32 0.0, %v497
        %v499 = vpop.f32.mrf.mxu0
        %500 = vmatprep.mubr.f32.mxu0 0.0
        %501 = vmatmul.mubr.f32.gmra.mxu0 %v301
        %v502 = vpop.f32.mrf.mxu0
        %v503 = vadd.f32 0.0, %v502
        %v504 = vpop.f32.mrf.mxu0
        %505 = vdwg.mxu0
        %v506 = vld [vmem:[#allocation3] sm:$0xff]
        %v507 = vld [vmem:[#allocation3 + $0x8] sm:$0xff]
        %v508 = vmul.f32 %v506, 0.5
        %v509 = vmul.f32 %v507, 0.5
        %v510 = vadd.f32 %v508, %v498
        %v511 = vadd.f32 %v509, %v503
        %vm512 = vcmp.ge.f32.partialorder %v510, 1.0
        %vm513 = vcmp.ge.f32.partialorder %v511, 1.0
        %v514 = vsel %vm512, 1, 0
        %v515 = vsel %vm513, 1, 0
        %v516 = vcvt.s32.f32 %v514
        %v517 = vcvt.s32.f32 %v515
        %v518 = vsub.f32 1.0, %v516
        %v519 = vsub.f32 1.0, %v517
        %v520 = vmul.f32 %v510, %v518
        %v521 = vmul.f32 %v511, %v519
        %522 = vst [vmem:[#allocation3] sm:$0xff] %v520
        %523 = vst [vmem:[#allocation3 + $0x8] sm:$0xff] %v521
        %v524 = vmul.f32 %v423, %v516
        %v525 = vmul.f32 %v428, %v517
        %526 = vmatprep.subr.mxu0 0.0
        %527 = vmatpush1.msra.mxu0 %v355
        %528 = vmatprep.subr.mxu0 0.0
        %529 = vmatpush1.msra.mxu0 %v354
        %530 = vmatprep.subr.mxu0 0.0
        %531 = vmatpush1.msra.mxu0 %v353
        %532 = vmatprep.subr.mxu0 0.0
        %533 = vmatpush1.msra.mxu0 %v352
        %534 = vmatprep.subr.mxu0 0.0
        %535 = vmatpush1.msra.mxu0 %v351
        %536 = vmatprep.subr.mxu0 0.0
        %537 = vmatpush1.msra.mxu0 %v350
        %538 = vmatprep.subr.mxu0 0.0
        %539 = vmatpush1.msra.mxu0 %v349
        %540 = vmatprep.subr.mxu0 0.0
        %541 = vmatpush1.msra.mxu0 %v348
        %542 = vmatprep.subr.mxu0 0.0
        %543 = vmatpush1.msra.mxu0 %v347
        %544 = vmatprep.subr.mxu0 0.0
        %545 = vmatpush1.msra.mxu0 %v346
        %546 = vmatprep.subr.mxu0 0.0
        %547 = vmatpush1.msra.mxu0 %v345
        %548 = vmatprep.subr.mxu0 0.0
        %549 = vmatpush1.msra.mxu0 %v344
        %550 = vmatprep.subr.mxu0 0.0
        %551 = vmatpush1.msra.mxu0 %v343
        %552 = vmatprep.subr.mxu0 0.0
        %553 = vmatpush1.msra.mxu0 %v342
        %554 = vmatprep.subr.mxu0 0.0
        %555 = vmatpush1.msra.mxu0 %v341
        %556 = vmatprep.subr.mxu0 0.0
        %557 = vmatpush1.msra.mxu0 %v340
        %558 = vmatprep.subr.mxu0 0.0
        %559 = vmatpush2.msra.mxu0 0.0
        %560 = vmatprep.subr.mxu0 0.0
        %561 = vmatpush2.msra.mxu0 0.0
        %562 = vmatprep.subr.mxu0 0.0
        %563 = vmatpush2.msra.mxu0 0.0
        %564 = vmatprep.subr.mxu0 0.0
        %565 = vmatpush2.msra.mxu0 0.0
        %566 = vmatprep.subr.mxu0 0.0
        %567 = vmatpush2.msra.mxu0 0.0
        %568 = vmatprep.subr.mxu0 0.0
        %569 = vmatpush2.msra.mxu0 0.0
        %570 = vmatprep.subr.mxu0 0.0
        %571 = vmatpush2.msra.mxu0 0.0
        %572 = vmatprep.subr.mxu0 0.0
        %573 = vmatpush2.msra.mxu0 0.0
        %574 = vmatprep.subr.mxu0 0.0
        %575 = vmatpush2.msra.mxu0 0.0
        %576 = vmatprep.subr.mxu0 0.0
        %577 = vmatpush2.msra.mxu0 0.0
        %578 = vmatprep.subr.mxu0 0.0
        %579 = vmatpush2.msra.mxu0 0.0
        %580 = vmatprep.subr.mxu0 0.0
        %581 = vmatpush2.msra.mxu0 0.0
        %582 = vmatprep.subr.mxu0 0.0
        %583 = vmatpush2.msra.mxu0 0.0
        %584 = vmatprep.subr.mxu0 0.0
        %585 = vmatpush2.msra.mxu0 0.0
        %586 = vmatprep.subr.mxu0 0.0
        %587 = vmatpush2.msra.mxu0 0.0
        %588 = vmatprep.subr.mxu0 0.0
        %589 = vmatpush2.msra.mxu0 0.0
        %590 = vmatprep.mubr.f32.mxu0 0.0
        %591 = vmatmul.mubr.f32.gmra.mxu0 %v524
        %v592 = vpop.f32.mrf.mxu0
        %v593 = vadd.f32 0.0, %v592
        %v594 = vpop.f32.mrf.mxu0
        %595 = vmatprep.mubr.f32.mxu0 0.0
        %596 = vmatmul.mubr.f32.gmra.mxu0 %v525
        %v597 = vpop.f32.mrf.mxu0
        %v598 = vadd.f32 0.0, %v597
        %v599 = vpop.f32.mrf.mxu0
        %600 = vdwg.mxu0
        %601 = vst [vmem:[%s277] sm:$0xff] %v593
        %602 = vst [vmem:[%s277 + $0x8] sm:$0xff] %v598
        %s603 = sand.u32 %s136, 1
        %s604 = scalar_lea.sflag [#allocation6], %s603
        %s605 = sand.u32 %s136, 1
        %s606 = smul.addr %s605, 16
        %s607 = scalar_lea.vmem [#allocation12], %s606
        // Predicated region
        $region57: #{tpu_custom_call.1} parent=35 // pred_check
          %p608 = pneg %p146
        $region58: #{tpu_custom_call.1} parent=35 // pred_check_branch
          %610 = sbr.rel (%p608) target = $region60
        $region59: #{tpu_custom_call.1} parent=35 // pred_region
          %s611 = smul.u32 2, %s27
          %s613 = ssub.s32 256, 256
          %614 = vsyncadd %s604, %s613
          %s615 = smul.addr %s28, 2
          %s616 = sadd.s32 %s611, %s615
          %s617 = smul.addr %s616, 128
          %s618 = scalar_lea.hbm %s4, %s617
          %s619 = sshll.u32 %s607, 4
          %s620 = int_to_ptr.vmem [resolvable:$true] %s619
          %625 = dma.vmem_to_hbm [thread:$0]  %s620, 256, %s618, %s604, 128, 128, 8
        $region60: #{tpu_custom_call.1} parent=35 // pred_fallthru
          _
      $region36: #{tpu_custom_call.1} parent=5 // pred_fallthru
        _
      %p626 = scmp.le.s32.totalorder 2, %s18
      // Predicated region
      $region61: #{tpu_custom_call.1} parent=5 // pred_check
        %p627 = pneg %p626
      $region62: #{tpu_custom_call.1} parent=5 // pred_check_branch
        %629 = sbr.rel (%p627) target = $region64
      $region63: #{tpu_custom_call.1} parent=5 // pred_region
        %s630 = ssub.s32 %s18, 2
        // Predicated region
        $region65: #{tpu_custom_call.1} parent=63 // pred_check
          %p631 = pneg %p152
        $region66: #{tpu_custom_call.1} parent=63 // pred_check_branch
          %633 = sbr.rel (%p631) target = $region68
        $region67: #{tpu_custom_call.1} parent=63 // pred_region
          %s634 = sand.u32 %s137, 1
          %s635 = scalar_lea.sflag [#allocation6], %s634
          %s636 = sand.u32 %s137, 1
          %s637 = smul.addr %s636, 16
          %s638 = scalar_lea.vmem [#allocation12], %s637
          %639 = dma.done %s635, 256
        $region68: #{tpu_custom_call.1} parent=63 // pred_fallthru
          _
      $region64: #{tpu_custom_call.1} parent=5 // pred_fallthru
        _
    $region6: #{tpu_custom_call.1} parent=1 // loop_footer
      %s22 = sadd.s32 1, %s18
    $region7: #{tpu_custom_call.1} parent=1 // loop_footer_branch
      %17 = sbr.rel target = $region3
    $region8: #{tpu_custom_call.1} parent=1 // loop_exit
      _
    %640 = vsyncpa [#allocation5], 1
    %s641 = scalar_lea.sflag [#allocation5], 1
    %642 = vsyncpa %s641, 1
    %643 = vsyncpa [#allocation8], 1
    %644 = vsyncpa [#allocation11], 1
    %645 = vsyncpa [#allocation6], 1
    %s646 = scalar_lea.sflag [#allocation6], 1
    %647 = vsyncpa %s646, 1

</llo_original>
